<compile_context>
chip_gen: v5e
topology: v5e:2x2
jax: 0.10.0
libtpu: 0.0.40
codegen_flags: <defaults>
</compile_context>

<pallas_src>
import jax
import jax.numpy as jnp
from jax.experimental import pallas as pl
from jax.experimental.pallas import tpu as pltpu

IN_FEATURES = 3 * 32 * 32    # 3072
OUT_FEATURES = 10
N_PAD = 128                  # lane-dense padded output width
MAX_TM = 1024                # batch-tile cap (1024*3072*4B = 12 MB per buffer)
VMEM_LIMIT = 64 * 1024 * 1024


def lazynet_kernel(x_ref, w_ref, b_ref, o_ref):
    # One MXU matmul per batch tile; weight and bias stay resident in VMEM.
    o_ref[...] = (
        jnp.dot(x_ref[...], w_ref[...], preferred_element_type=jnp.float32)
        + b_ref[...]
    ).astype(o_ref.dtype)


def prepare_params(weight, bias):
    """One-time parameter prep (hoisted out of the forward path).

    weight: [10, 3072] (PyTorch nn.Linear layout), bias: [10].
    Returns lane-padded w_t [3072, 128] and bias [1, 128].
    """
    w_t = jnp.zeros((IN_FEATURES, N_PAD), dtype=jnp.float32)
    w_t = w_t.at[:, :OUT_FEATURES].set(weight.T.astype(jnp.float32))
    b_pad = jnp.zeros((1, N_PAD), dtype=jnp.float32)
    b_pad = b_pad.at[:, :OUT_FEATURES].set(bias.astype(jnp.float32))
    return w_t, b_pad


def _round_up(n, m):
    return ((n + m - 1) // m) * m


def _pick_tile(b):
    # Aim for >=4 grid steps (DMA/compute overlap + cross-TC sharding on v7x),
    # keep the tile a multiple of 8 sublanes, and cap at MAX_TM for VMEM.
    tm = _round_up(pl.cdiv(b, 4), 8)
    return max(8, min(MAX_TM, tm))


def lazynet_forward(x_nchw, w_pad, b_pad):
    """x_nchw: [B, 3, 32, 32] f32; w_pad: [3072, 128]; b_pad: [1, 128]."""
    B = x_nchw.shape[0]
    x_flat = x_nchw.reshape(B, IN_FEATURES)          # nn.Flatten() on NCHW

    tm = _pick_tile(B)
    grid = (pl.cdiv(B, tm),)                         # ragged last block is masked

    out = pl.pallas_call(
        lazynet_kernel,
        out_shape=jax.ShapeDtypeStruct((B, N_PAD), jnp.float32),
        grid_spec=pltpu.PrefetchScalarGridSpec(
            num_scalar_prefetch=0,
            grid=grid,
            in_specs=[
                # Streaming x tile (double-buffered by default).
                pl.BlockSpec((tm, IN_FEATURES), lambda i: (i, 0)),
                # Resident weight / bias: constant index_map -> fetch once,
                # single-buffered to save ~1.6 MB VMEM.
                pl.BlockSpec((IN_FEATURES, N_PAD), lambda i: (0, 0),
                             pipeline_mode=pl.Buffered(1)),
                pl.BlockSpec((1, N_PAD), lambda i: (0, 0),
                             pipeline_mode=pl.Buffered(1)),
            ],
            out_specs=pl.BlockSpec((tm, N_PAD), lambda i: (i, 0)),
        ),
        compiler_params=pltpu.CompilerParams(
            dimension_semantics=("parallel",),   # shardable across v7x's 2 TCs
            vmem_limit_bytes=VMEM_LIMIT,         # lift v5e/v6e default scoped limit
        ),
    )(x_flat, w_pad, b_pad)

    return out[:, :OUT_FEATURES]


if __name__ == "__main__":
    key = jax.random.PRNGKey(0)
    kx, kw, kb = jax.random.split(key, 3)

    B = 2
    x = jax.random.normal(kx, (B, 3, 32, 32), dtype=jnp.float32)

    # Deterministic parameter init matching nn.Linear(3072, 10) shapes.
    bound = 1.0 / (IN_FEATURES ** 0.5)
    weight = jax.random.uniform(
        kw, (OUT_FEATURES, IN_FEATURES), dtype=jnp.float32, minval=-bound, maxval=bound
    )
    bias = jax.random.uniform(
        kb, (OUT_FEATURES,), dtype=jnp.float32, minval=-bound, maxval=bound
    )

    w_pad, b_pad = prepare_params(weight, bias)      # hoisted out of forward

    out = lazynet_forward(x, w_pad, b_pad)
    out = jax.block_until_ready(out)

    # Reference check in plain JAX.
    ref = x.reshape(B, IN_FEATURES) @ weight.T + bias
    assert out.shape == (B, OUT_FEATURES)
    assert jnp.allclose(out, ref, atol=1e-4, rtol=1e-4)

    print("KERNEL_OK")
</pallas_src>

<mosaic_0001>
module attributes {stable_mosaic.version = 11 : i64} {
  func.func @lazynet_kernel(%arg0: i32, %arg1: memref<8x3072xf32, #tpu.memory_space<vmem>>, %arg2: memref<3072x128xf32, #tpu.memory_space<vmem>>, %arg3: memref<1x128xf32, #tpu.memory_space<vmem>>, %arg4: memref<8x128xf32, #tpu.memory_space<vmem>>) attributes {dimension_semantics = [#tpu.dimension_semantics<parallel>], iteration_bounds = array<i64: 1>, scalar_prefetch = 0 : i64, scratch_operands = 0 : i64, tpu.core_type = #tpu.core_type<tc>, window_params = [{transform_indices = @transform_0, window_bounds = array<i64: 8, 3072>}, {pipeline_mode = #tpu.pipeline_mode<synchronous>, transform_indices = @transform_1, window_bounds = array<i64: 3072, 128>}, {pipeline_mode = #tpu.pipeline_mode<synchronous>, transform_indices = @transform_2, window_bounds = array<i64: 1, 128>}, {transform_indices = @transform_3, window_bounds = array<i64: 8, 128>}]} {
    %c0 = arith.constant 0 : index
    %c0_0 = arith.constant 0 : index
    %0 = vector.load %arg1[%c0, %c0_0] : memref<8x3072xf32, #tpu.memory_space<vmem>>, vector<8x3072xf32>
    %c0_1 = arith.constant 0 : index
    %c0_2 = arith.constant 0 : index
    %1 = vector.load %arg2[%c0_1, %c0_2] : memref<3072x128xf32, #tpu.memory_space<vmem>>, vector<3072x128xf32>
    %cst = arith.constant dense<0.000000e+00> : vector<8x128xf32>
    %2 = tpu.matmul %0, %1, %cst {dimension_numbers = #tpu.dot_dimension_numbers<[1], [0], [0], [1], [0, 0, 1, 1], [], []>} : vector<8x3072xf32>, vector<3072x128xf32>, vector<8x128xf32> -> vector<8x128xf32>
    %c0_3 = arith.constant 0 : index
    %c0_4 = arith.constant 0 : index
    %3 = vector.load %arg3[%c0_3, %c0_4] : memref<1x128xf32, #tpu.memory_space<vmem>>, vector<1x128xf32>
    %4 = vector.broadcast %3 : vector<1x128xf32> to vector<8x128xf32>
    %5 = arith.addf %2, %4 : vector<8x128xf32>
    %c0_5 = arith.constant 0 : index
    %c0_6 = arith.constant 0 : index
    %6 = vector.load %arg4[%c0_5, %c0_6] : memref<8x128xf32, #tpu.memory_space<vmem>>, vector<8x128xf32>
    tpu.vector_store %arg4[%c0_5, %c0_6], %5 {strides = array<i32>} : memref<8x128xf32, #tpu.memory_space<vmem>>, vector<8x128xf32>,
    return
  }
  func.func @transform_0(%arg0: i32) -> (i32, i32) {
    %c0_i32 = arith.constant 0 : i32
    %c0_i32_0 = arith.constant 0 : i32
    return %arg0, %c0_i32 : i32, i32
  }
  func.func @transform_1(%arg0: i32) -> (i32, i32) {
    %c0_i32 = arith.constant 0 : i32
    %c0_i32_0 = arith.constant 0 : i32
    %c0_i32_1 = arith.constant 0 : i32
    return %c0_i32, %c0_i32_0 : i32, i32
  }
  func.func @transform_2(%arg0: i32) -> (i32, i32) {
    %c0_i32 = arith.constant 0 : i32
    %c0_i32_0 = arith.constant 0 : i32
    %c0_i32_1 = arith.constant 0 : i32
    return %c0_i32, %c0_i32_0 : i32, i32
  }
  func.func @transform_3(%arg0: i32) -> (i32, i32) {
    %c0_i32 = arith.constant 0 : i32
    %c0_i32_0 = arith.constant 0 : i32
    return %arg0, %c0_i32 : i32, i32
  }
}

</mosaic_0001>

<llo_original>
// kernel: tpu_custom_call.1
$region0: #{tpu_custom_call.1}
  #allocation0 [shape = 'u32[]', space=smem, size = 0x4, offset = 0x4, fixed_abs, tag = 'smem constant byte address 0x4 - core index']
  #allocation1 [shape = 'u32[72,128]{1,0:T(1,128)}', space=vmem, size = 0x9000, scoped, tag = 'internal scratch']
  %s0 = inlined_call_operand.hbm [shape: f32[2,3072], index: 0, kind: input, shape index: {}]
  %s1 = inlined_call_operand.hbm [shape: f32[3072,128], index: 1, kind: input, shape index: {}]
  %s2 = inlined_call_operand.hbm [shape: f32[1,128], index: 2, kind: input, shape index: {}]
  %s3 = inlined_call_operand.hbm [shape: f32[2,128], index: 3, kind: output, shape index: {}]
  %s4 = sld [smem:[#allocation0]]
  $region34: #{tpu_custom_call.1} parent=0
    _
  %s6 = ssub.s32 1, %s4
  %s7 = scalar_select 0, %s6, %s4
  $region1: #{tpu_custom_call.1} parent=0
    #allocation2 [shape = 'u8[98304]{0}', space=vmem, size = 0x18000, scoped, tag = 'input window, operand 0, single buffered']
    #allocation3 [shape = 's32[1]{0}', space=sflag, size = 0x4, scoped, tag = 'scoped memory for tpu_custom_call.1']
    #allocation4 [shape = 's32[1]{0}', space=sflag, size = 0x4, scoped, tag = 'scoped memory for tpu_custom_call.1']
    #allocation5 [shape = 'u8[1572864]{0}', space=vmem, size = 0x180000, scoped, tag = 'input window, operand 1, single buffered']
    #allocation6 [shape = 's32[1]{0}', space=sflag, size = 0x4, scoped, tag = 'scoped memory for tpu_custom_call.1']
    #allocation7 [shape = 'u8[512]{0}', space=vmem, size = 0x400, scoped, tag = 'input window, operand 2, single buffered']
    #allocation8 [shape = 'u8[4096]{0}', space=vmem, size = 0x1000, scoped, tag = 'output window, operand 0, single buffered']
    %8 = vsyncpa [#allocation3], 0
    %9 = vsyncpa [#allocation6], 0
    %10 = vsyncpa [#allocation4], 0
    // Predicated region
    $region2: #{tpu_custom_call.1} parent=1 // pred_check
      _
    $region3: #{tpu_custom_call.1} parent=1 // pred_check_branch
      %12 = sbr.rel (0) target = $region5
    $region4: #{tpu_custom_call.1} parent=1 // pred_region
      %14 = vsyncadd [#allocation3], 2304
      %s15 = sshll.u32 %s0, 4
      %s16 = int_to_ptr.hbm [resolvable:$true] %s15
      %s17 = sshll.u32 [#allocation2], 4
      %s18 = int_to_ptr.vmem [resolvable:$true] %s17
      %23 = dma.hbm_to_vmem [thread:$0]  %s16, 768, %s18, [#allocation3], 768, 768, 48
    $region5: #{tpu_custom_call.1} parent=1 // pred_fallthru
      _
    // Predicated region
    $region6: #{tpu_custom_call.1} parent=1 // pred_check
      _
    $region7: #{tpu_custom_call.1} parent=1 // pred_check_branch
      %25 = sbr.rel (0) target = $region9
    $region8: #{tpu_custom_call.1} parent=1 // pred_region
      %27 = vsyncadd [#allocation6], 0
      %s28 = sshll.u32 %s1, 4
      %s29 = int_to_ptr.hbm [resolvable:$true] %s28
      %s30 = sshll.u32 [#allocation5], 4
      %s31 = int_to_ptr.vmem [resolvable:$true] %s30
      %36 = dma.hbm_to_vmem [thread:$0]  %s29, 49152, %s31, [#allocation6], 128, 128, 8
    $region9: #{tpu_custom_call.1} parent=1 // pred_fallthru
      _
    // Predicated region
    $region10: #{tpu_custom_call.1} parent=1 // pred_check
      _
    $region11: #{tpu_custom_call.1} parent=1 // pred_check_branch
      %38 = sbr.rel (0) target = $region13
    $region12: #{tpu_custom_call.1} parent=1 // pred_region
      %40 = vsyncadd [#allocation6], 0
      %s42 = sshll.u32 %s2, 4
      %s43 = int_to_ptr.hbm [resolvable:$true] %s42
      %s44 = sshll.u32 [#allocation7], 4
      %s45 = int_to_ptr.vmem [resolvable:$true] %s44
      %47 = dma.hbm_to_vmem [thread:$0]  %s43, 16, %s45, [#allocation6]
    $region13: #{tpu_custom_call.1} parent=1 // pred_fallthru
      _
    // Predicated region
    $region14: #{tpu_custom_call.1} parent=1 // pred_check
      _
    $region15: #{tpu_custom_call.1} parent=1 // pred_check_branch
      %49 = sbr.rel (0) target = $region17
    $region16: #{tpu_custom_call.1} parent=1 // pred_region
      %51 = dma.done [#allocation3], 3072
    $region17: #{tpu_custom_call.1} parent=1 // pred_fallthru
      _
    // Predicated region
    $region18: #{tpu_custom_call.1} parent=1 // pred_check
      _
    $region19: #{tpu_custom_call.1} parent=1 // pred_check_branch
      %53 = sbr.rel (0) target = $region21
    $region20: #{tpu_custom_call.1} parent=1 // pred_region
      %55 = dma.done [#allocation6], 49152
    $region21: #{tpu_custom_call.1} parent=1 // pred_fallthru
      _
    // Predicated region
    $region22: #{tpu_custom_call.1} parent=1 // pred_check
      _
    $region23: #{tpu_custom_call.1} parent=1 // pred_check_branch
      %57 = sbr.rel (0) target = $region25
    $region24: #{tpu_custom_call.1} parent=1 // pred_region
      %59 = dma.done [#allocation6], 16
    $region25: #{tpu_custom_call.1} parent=1 // pred_fallthru
      _
    %v60 = vld [vmem:[#allocation2] sm:$0xff]
    %v61 = vld [vmem:[#allocation2 + $0x8] sm:$0xff]
    %v62 = vld [vmem:[#allocation2 + $0x10] sm:$0xff]
    %v63 = vld [vmem:[#allocation2 + $0x18] sm:$0xff]
    %v64 = vld [vmem:[#allocation2 + $0x20] sm:$0xff]
    %v65 = vld [vmem:[#allocation2 + $0x28] sm:$0xff]
    %v66 = vld [vmem:[#allocation2 + $0x30] sm:$0xff]
    %v67 = vld [vmem:[#allocation2 + $0x38] sm:$0xff]
    %v68 = vld [vmem:[#allocation2 + $0x40] sm:$0xff]
    %v69 = vld [vmem:[#allocation2 + $0x48] sm:$0xff]
    %v70 = vld [vmem:[#allocation2 + $0x50] sm:$0xff]
    %v71 = vld [vmem:[#allocation2 + $0x58] sm:$0xff]
    %v72 = vld [vmem:[#allocation2 + $0x60] sm:$0xff]
    %v73 = vld [vmem:[#allocation2 + $0x68] sm:$0xff]
    %v74 = vld [vmem:[#allocation2 + $0x70] sm:$0xff]
    %v75 = vld [vmem:[#allocation2 + $0x78] sm:$0xff]
    %v76 = vld [vmem:[#allocation2 + $0x80] sm:$0xff]
    %v77 = vld [vmem:[#allocation2 + $0x88] sm:$0xff]
    %v78 = vld [vmem:[#allocation2 + $0x90] sm:$0xff]
    %v79 = vld [vmem:[#allocation2 + $0x98] sm:$0xff]
    %v80 = vld [vmem:[#allocation2 + $0xa0] sm:$0xff]
    %v81 = vld [vmem:[#allocation2 + $0xa8] sm:$0xff]
    %v82 = vld [vmem:[#allocation2 + $0xb0] sm:$0xff]
    %v83 = vld [vmem:[#allocation2 + $0xb8] sm:$0xff]
    %v84 = vld [vmem:[#allocation5] sm:$0xff]
    %v85 = vld [vmem:[#allocation5 + $0x8] sm:$0xff]
    %v86 = vld [vmem:[#allocation5 + $0x10] sm:$0xff]
    %v87 = vld [vmem:[#allocation5 + $0x18] sm:$0xff]
    %v88 = vld [vmem:[#allocation5 + $0x20] sm:$0xff]
    %v89 = vld [vmem:[#allocation5 + $0x28] sm:$0xff]
    %v90 = vld [vmem:[#allocation5 + $0x30] sm:$0xff]
    %v91 = vld [vmem:[#allocation5 + $0x38] sm:$0xff]
    %v92 = vld [vmem:[#allocation5 + $0x40] sm:$0xff]
    %v93 = vld [vmem:[#allocation5 + $0x48] sm:$0xff]
    %v94 = vld [vmem:[#allocation5 + $0x50] sm:$0xff]
    %v95 = vld [vmem:[#allocation5 + $0x58] sm:$0xff]
    %v96 = vld [vmem:[#allocation5 + $0x60] sm:$0xff]
    %v97 = vld [vmem:[#allocation5 + $0x68] sm:$0xff]
    %v98 = vld [vmem:[#allocation5 + $0x70] sm:$0xff]
    %v99 = vld [vmem:[#allocation5 + $0x78] sm:$0xff]
    %v100 = vld [vmem:[#allocation5 + $0x80] sm:$0xff]
    %v101 = vld [vmem:[#allocation5 + $0x88] sm:$0xff]
    %v102 = vld [vmem:[#allocation5 + $0x90] sm:$0xff]
    %v103 = vld [vmem:[#allocation5 + $0x98] sm:$0xff]
    %v104 = vld [vmem:[#allocation5 + $0xa0] sm:$0xff]
    %v105 = vld [vmem:[#allocation5 + $0xa8] sm:$0xff]
    %v106 = vld [vmem:[#allocation5 + $0xb0] sm:$0xff]
    %v107 = vld [vmem:[#allocation5 + $0xb8] sm:$0xff]
    %v108 = vld [vmem:[#allocation5 + $0xc0] sm:$0xff]
    %v109 = vld [vmem:[#allocation5 + $0xc8] sm:$0xff]
    %v110 = vld [vmem:[#allocation5 + $0xd0] sm:$0xff]
    %v111 = vld [vmem:[#allocation5 + $0xd8] sm:$0xff]
    %v112 = vld [vmem:[#allocation5 + $0xe0] sm:$0xff]
    %v113 = vld [vmem:[#allocation5 + $0xe8] sm:$0xff]
    %v114 = vld [vmem:[#allocation5 + $0xf0] sm:$0xff]
    %v115 = vld [vmem:[#allocation5 + $0xf8] sm:$0xff]
    %v116 = vld [vmem:[#allocation5 + $0x100] sm:$0xff]
    %v117 = vld [vmem:[#allocation5 + $0x108] sm:$0xff]
    %v118 = vld [vmem:[#allocation5 + $0x110] sm:$0xff]
    %v119 = vld [vmem:[#allocation5 + $0x118] sm:$0xff]
    %v120 = vld [vmem:[#allocation5 + $0x120] sm:$0xff]
    %v121 = vld [vmem:[#allocation5 + $0x128] sm:$0xff]
    %v122 = vld [vmem:[#allocation5 + $0x130] sm:$0xff]
    %v123 = vld [vmem:[#allocation5 + $0x138] sm:$0xff]
    %v124 = vld [vmem:[#allocation5 + $0x140] sm:$0xff]
    %v125 = vld [vmem:[#allocation5 + $0x148] sm:$0xff]
    %v126 = vld [vmem:[#allocation5 + $0x150] sm:$0xff]
    %v127 = vld [vmem:[#allocation5 + $0x158] sm:$0xff]
    %v128 = vld [vmem:[#allocation5 + $0x160] sm:$0xff]
    %v129 = vld [vmem:[#allocation5 + $0x168] sm:$0xff]
    %v130 = vld [vmem:[#allocation5 + $0x170] sm:$0xff]
    %v131 = vld [vmem:[#allocation5 + $0x178] sm:$0xff]
    %v132 = vld [vmem:[#allocation5 + $0x180] sm:$0xff]
    %v133 = vld [vmem:[#allocation5 + $0x188] sm:$0xff]
    %v134 = vld [vmem:[#allocation5 + $0x190] sm:$0xff]
    %v135 = vld [vmem:[#allocation5 + $0x198] sm:$0xff]
    %v136 = vld [vmem:[#allocation5 + $0x1a0] sm:$0xff]
    %v137 = vld [vmem:[#allocation5 + $0x1a8] sm:$0xff]
    %v138 = vld [vmem:[#allocation5 + $0x1b0] sm:$0xff]
    %v139 = vld [vmem:[#allocation5 + $0x1b8] sm:$0xff]
    %v140 = vld [vmem:[#allocation5 + $0x1c0] sm:$0xff]
    %v141 = vld [vmem:[#allocation5 + $0x1c8] sm:$0xff]
    %v142 = vld [vmem:[#allocation5 + $0x1d0] sm:$0xff]
    %v143 = vld [vmem:[#allocation5 + $0x1d8] sm:$0xff]
    %v144 = vld [vmem:[#allocation5 + $0x1e0] sm:$0xff]
    %v145 = vld [vmem:[#allocation5 + $0x1e8] sm:$0xff]
    %v146 = vld [vmem:[#allocation5 + $0x1f0] sm:$0xff]
    %v147 = vld [vmem:[#allocation5 + $0x1f8] sm:$0xff]
    %v148 = vld [vmem:[#allocation5 + $0x200] sm:$0xff]
    %v149 = vld [vmem:[#allocation5 + $0x208] sm:$0xff]
    %v150 = vld [vmem:[#allocation5 + $0x210] sm:$0xff]
    %v151 = vld [vmem:[#allocation5 + $0x218] sm:$0xff]
    %v152 = vld [vmem:[#allocation5 + $0x220] sm:$0xff]
    %v153 = vld [vmem:[#allocation5 + $0x228] sm:$0xff]
    %v154 = vld [vmem:[#allocation5 + $0x230] sm:$0xff]
    %v155 = vld [vmem:[#allocation5 + $0x238] sm:$0xff]
    %v156 = vld [vmem:[#allocation5 + $0x240] sm:$0xff]
    %v157 = vld [vmem:[#allocation5 + $0x248] sm:$0xff]
    %v158 = vld [vmem:[#allocation5 + $0x250] sm:$0xff]
    %v159 = vld [vmem:[#allocation5 + $0x258] sm:$0xff]
    %v160 = vld [vmem:[#allocation5 + $0x260] sm:$0xff]
    %v161 = vld [vmem:[#allocation5 + $0x268] sm:$0xff]
    %v162 = vld [vmem:[#allocation5 + $0x270] sm:$0xff]
    %v163 = vld [vmem:[#allocation5 + $0x278] sm:$0xff]
    %v164 = vld [vmem:[#allocation5 + $0x280] sm:$0xff]
    %v165 = vld [vmem:[#allocation5 + $0x288] sm:$0xff]
    %v166 = vld [vmem:[#allocation5 + $0x290] sm:$0xff]
    %v167 = vld [vmem:[#allocation5 + $0x298] sm:$0xff]
    %v168 = vld [vmem:[#allocation5 + $0x2a0] sm:$0xff]
    %v169 = vld [vmem:[#allocation5 + $0x2a8] sm:$0xff]
    %v170 = vld [vmem:[#allocation5 + $0x2b0] sm:$0xff]
    %v171 = vld [vmem:[#allocation5 + $0x2b8] sm:$0xff]
    %v172 = vld [vmem:[#allocation5 + $0x2c0] sm:$0xff]
    %v173 = vld [vmem:[#allocation5 + $0x2c8] sm:$0xff]
    %v174 = vld [vmem:[#allocation5 + $0x2d0] sm:$0xff]
    %v175 = vld [vmem:[#allocation5 + $0x2d8] sm:$0xff]
    %v176 = vld [vmem:[#allocation5 + $0x2e0] sm:$0xff]
    %v177 = vld [vmem:[#allocation5 + $0x2e8] sm:$0xff]
    %v178 = vld [vmem:[#allocation5 + $0x2f0] sm:$0xff]
    %v179 = vld [vmem:[#allocation5 + $0x2f8] sm:$0xff]
    %v180 = vld [vmem:[#allocation5 + $0x300] sm:$0xff]
    %v181 = vld [vmem:[#allocation5 + $0x308] sm:$0xff]
    %v182 = vld [vmem:[#allocation5 + $0x310] sm:$0xff]
    %v183 = vld [vmem:[#allocation5 + $0x318] sm:$0xff]
    %v184 = vld [vmem:[#allocation5 + $0x320] sm:$0xff]
    %v185 = vld [vmem:[#allocation5 + $0x328] sm:$0xff]
    %v186 = vld [vmem:[#allocation5 + $0x330] sm:$0xff]
    %v187 = vld [vmem:[#allocation5 + $0x338] sm:$0xff]
    %v188 = vld [vmem:[#allocation5 + $0x340] sm:$0xff]
    %v189 = vld [vmem:[#allocation5 + $0x348] sm:$0xff]
    %v190 = vld [vmem:[#allocation5 + $0x350] sm:$0xff]
    %v191 = vld [vmem:[#allocation5 + $0x358] sm:$0xff]
    %v192 = vld [vmem:[#allocation5 + $0x360] sm:$0xff]
    %v193 = vld [vmem:[#allocation5 + $0x368] sm:$0xff]
    %v194 = vld [vmem:[#allocation5 + $0x370] sm:$0xff]
    %v195 = vld [vmem:[#allocation5 + $0x378] sm:$0xff]
    %v196 = vld [vmem:[#allocation5 + $0x380] sm:$0xff]
    %v197 = vld [vmem:[#allocation5 + $0x388] sm:$0xff]
    %v198 = vld [vmem:[#allocation5 + $0x390] sm:$0xff]
    %v199 = vld [vmem:[#allocation5 + $0x398] sm:$0xff]
    %v200 = vld [vmem:[#allocation5 + $0x3a0] sm:$0xff]
    %v201 = vld [vmem:[#allocation5 + $0x3a8] sm:$0xff]
    %v202 = vld [vmem:[#allocation5 + $0x3b0] sm:$0xff]
    %v203 = vld [vmem:[#allocation5 + $0x3b8] sm:$0xff]
    %v204 = vld [vmem:[#allocation5 + $0x3c0] sm:$0xff]
    %v205 = vld [vmem:[#allocation5 + $0x3c8] sm:$0xff]
    %v206 = vld [vmem:[#allocation5 + $0x3d0] sm:$0xff]
    %v207 = vld [vmem:[#allocation5 + $0x3d8] sm:$0xff]
    %v208 = vld [vmem:[#allocation5 + $0x3e0] sm:$0xff]
    %v209 = vld [vmem:[#allocation5 + $0x3e8] sm:$0xff]
    %v210 = vld [vmem:[#allocation5 + $0x3f0] sm:$0xff]
    %v211 = vld [vmem:[#allocation5 + $0x3f8] sm:$0xff]
    %v212 = vld [vmem:[#allocation5 + $0x400] sm:$0xff]
    %v213 = vld [vmem:[#allocation5 + $0x408] sm:$0xff]
    %v214 = vld [vmem:[#allocation5 + $0x410] sm:$0xff]
    %v215 = vld [vmem:[#allocation5 + $0x418] sm:$0xff]
    %v216 = vld [vmem:[#allocation5 + $0x420] sm:$0xff]
    %v217 = vld [vmem:[#allocation5 + $0x428] sm:$0xff]
    %v218 = vld [vmem:[#allocation5 + $0x430] sm:$0xff]
    %v219 = vld [vmem:[#allocation5 + $0x438] sm:$0xff]
    %v220 = vld [vmem:[#allocation5 + $0x440] sm:$0xff]
    %v221 = vld [vmem:[#allocation5 + $0x448] sm:$0xff]
    %v222 = vld [vmem:[#allocation5 + $0x450] sm:$0xff]
    %v223 = vld [vmem:[#allocation5 + $0x458] sm:$0xff]
    %v224 = vld [vmem:[#allocation5 + $0x460] sm:$0xff]
    %v225 = vld [vmem:[#allocation5 + $0x468] sm:$0xff]
    %v226 = vld [vmem:[#allocation5 + $0x470] sm:$0xff]
    %v227 = vld [vmem:[#allocation5 + $0x478] sm:$0xff]
    %v228 = vld [vmem:[#allocation5 + $0x480] sm:$0xff]
    %v229 = vld [vmem:[#allocation5 + $0x488] sm:$0xff]
    %v230 = vld [vmem:[#allocation5 + $0x490] sm:$0xff]
    %v231 = vld [vmem:[#allocation5 + $0x498] sm:$0xff]
    %v232 = vld [vmem:[#allocation5 + $0x4a0] sm:$0xff]
    %v233 = vld [vmem:[#allocation5 + $0x4a8] sm:$0xff]
    %v234 = vld [vmem:[#allocation5 + $0x4b0] sm:$0xff]
    %v235 = vld [vmem:[#allocation5 + $0x4b8] sm:$0xff]
    %v236 = vld [vmem:[#allocation5 + $0x4c0] sm:$0xff]
    %v237 = vld [vmem:[#allocation5 + $0x4c8] sm:$0xff]
    %v238 = vld [vmem:[#allocation5 + $0x4d0] sm:$0xff]
    %v239 = vld [vmem:[#allocation5 + $0x4d8] sm:$0xff]
    %v240 = vld [vmem:[#allocation5 + $0x4e0] sm:$0xff]
    %v241 = vld [vmem:[#allocation5 + $0x4e8] sm:$0xff]
    %v242 = vld [vmem:[#allocation5 + $0x4f0] sm:$0xff]
    %v243 = vld [vmem:[#allocation5 + $0x4f8] sm:$0xff]
    %v244 = vld [vmem:[#allocation5 + $0x500] sm:$0xff]
    %v245 = vld [vmem:[#allocation5 + $0x508] sm:$0xff]
    %v246 = vld [vmem:[#allocation5 + $0x510] sm:$0xff]
    %v247 = vld [vmem:[#allocation5 + $0x518] sm:$0xff]
    %v248 = vld [vmem:[#allocation5 + $0x520] sm:$0xff]
    %v249 = vld [vmem:[#allocation5 + $0x528] sm:$0xff]
    %v250 = vld [vmem:[#allocation5 + $0x530] sm:$0xff]
    %v251 = vld [vmem:[#allocation5 + $0x538] sm:$0xff]
    %v252 = vld [vmem:[#allocation5 + $0x540] sm:$0xff]
    %v253 = vld [vmem:[#allocation5 + $0x548] sm:$0xff]
    %v254 = vld [vmem:[#allocation5 + $0x550] sm:$0xff]
    %v255 = vld [vmem:[#allocation5 + $0x558] sm:$0xff]
    %v256 = vld [vmem:[#allocation5 + $0x560] sm:$0xff]
    %v257 = vld [vmem:[#allocation5 + $0x568] sm:$0xff]
    %v258 = vld [vmem:[#allocation5 + $0x570] sm:$0xff]
    %v259 = vld [vmem:[#allocation5 + $0x578] sm:$0xff]
    %v260 = vld [vmem:[#allocation5 + $0x580] sm:$0xff]
    %v261 = vld [vmem:[#allocation5 + $0x588] sm:$0xff]
    %v262 = vld [vmem:[#allocation5 + $0x590] sm:$0xff]
    %v263 = vld [vmem:[#allocation5 + $0x598] sm:$0xff]
    %v264 = vld [vmem:[#allocation5 + $0x5a0] sm:$0xff]
    %v265 = vld [vmem:[#allocation5 + $0x5a8] sm:$0xff]
    %v266 = vld [vmem:[#allocation5 + $0x5b0] sm:$0xff]
    %v267 = vld [vmem:[#allocation5 + $0x5b8] sm:$0xff]
    %v268 = vld [vmem:[#allocation5 + $0x5c0] sm:$0xff]
    %v269 = vld [vmem:[#allocation5 + $0x5c8] sm:$0xff]
    %v270 = vld [vmem:[#allocation5 + $0x5d0] sm:$0xff]
    %v271 = vld [vmem:[#allocation5 + $0x5d8] sm:$0xff]
    %v272 = vld [vmem:[#allocation5 + $0x5e0] sm:$0xff]
    %v273 = vld [vmem:[#allocation5 + $0x5e8] sm:$0xff]
    %v274 = vld [vmem:[#allocation5 + $0x5f0] sm:$0xff]
    %v275 = vld [vmem:[#allocation5 + $0x5f8] sm:$0xff]
    %v276 = vld [vmem:[#allocation5 + $0x600] sm:$0xff]
    %v277 = vld [vmem:[#allocation5 + $0x608] sm:$0xff]
    %v278 = vld [vmem:[#allocation5 + $0x610] sm:$0xff]
    %v279 = vld [vmem:[#allocation5 + $0x618] sm:$0xff]
    %v280 = vld [vmem:[#allocation5 + $0x620] sm:$0xff]
    %v281 = vld [vmem:[#allocation5 + $0x628] sm:$0xff]
    %v282 = vld [vmem:[#allocation5 + $0x630] sm:$0xff]
    %v283 = vld [vmem:[#allocation5 + $0x638] sm:$0xff]
    %v284 = vld [vmem:[#allocation5 + $0x640] sm:$0xff]
    %v285 = vld [vmem:[#allocation5 + $0x648] sm:$0xff]
    %v286 = vld [vmem:[#allocation5 + $0x650] sm:$0xff]
    %v287 = vld [vmem:[#allocation5 + $0x658] sm:$0xff]
    %v288 = vld [vmem:[#allocation5 + $0x660] sm:$0xff]
    %v289 = vld [vmem:[#allocation5 + $0x668] sm:$0xff]
    %v290 = vld [vmem:[#allocation5 + $0x670] sm:$0xff]
    %v291 = vld [vmem:[#allocation5 + $0x678] sm:$0xff]
    %v292 = vld [vmem:[#allocation5 + $0x680] sm:$0xff]
    %v293 = vld [vmem:[#allocation5 + $0x688] sm:$0xff]
    %v294 = vld [vmem:[#allocation5 + $0x690] sm:$0xff]
    %v295 = vld [vmem:[#allocation5 + $0x698] sm:$0xff]
    %v296 = vld [vmem:[#allocation5 + $0x6a0] sm:$0xff]
    %v297 = vld [vmem:[#allocation5 + $0x6a8] sm:$0xff]
    %v298 = vld [vmem:[#allocation5 + $0x6b0] sm:$0xff]
    %v299 = vld [vmem:[#allocation5 + $0x6b8] sm:$0xff]
    %v300 = vld [vmem:[#allocation5 + $0x6c0] sm:$0xff]
    %v301 = vld [vmem:[#allocation5 + $0x6c8] sm:$0xff]
    %v302 = vld [vmem:[#allocation5 + $0x6d0] sm:$0xff]
    %v303 = vld [vmem:[#allocation5 + $0x6d8] sm:$0xff]
    %v304 = vld [vmem:[#allocation5 + $0x6e0] sm:$0xff]
    %v305 = vld [vmem:[#allocation5 + $0x6e8] sm:$0xff]
    %v306 = vld [vmem:[#allocation5 + $0x6f0] sm:$0xff]
    %v307 = vld [vmem:[#allocation5 + $0x6f8] sm:$0xff]
    %v308 = vld [vmem:[#allocation5 + $0x700] sm:$0xff]
    %v309 = vld [vmem:[#allocation5 + $0x708] sm:$0xff]
    %v310 = vld [vmem:[#allocation5 + $0x710] sm:$0xff]
    %v311 = vld [vmem:[#allocation5 + $0x718] sm:$0xff]
    %v312 = vld [vmem:[#allocation5 + $0x720] sm:$0xff]
    %v313 = vld [vmem:[#allocation5 + $0x728] sm:$0xff]
    %v314 = vld [vmem:[#allocation5 + $0x730] sm:$0xff]
    %v315 = vld [vmem:[#allocation5 + $0x738] sm:$0xff]
    %v316 = vld [vmem:[#allocation5 + $0x740] sm:$0xff]
    %v317 = vld [vmem:[#allocation5 + $0x748] sm:$0xff]
    %v318 = vld [vmem:[#allocation5 + $0x750] sm:$0xff]
    %v319 = vld [vmem:[#allocation5 + $0x758] sm:$0xff]
    %v320 = vld [vmem:[#allocation5 + $0x760] sm:$0xff]
    %v321 = vld [vmem:[#allocation5 + $0x768] sm:$0xff]
    %v322 = vld [vmem:[#allocation5 + $0x770] sm:$0xff]
    %v323 = vld [vmem:[#allocation5 + $0x778] sm:$0xff]
    %v324 = vld [vmem:[#allocation5 + $0x780] sm:$0xff]
    %v325 = vld [vmem:[#allocation5 + $0x788] sm:$0xff]
    %v326 = vld [vmem:[#allocation5 + $0x790] sm:$0xff]
    %v327 = vld [vmem:[#allocation5 + $0x798] sm:$0xff]
    %v328 = vld [vmem:[#allocation5 + $0x7a0] sm:$0xff]
    %v329 = vld [vmem:[#allocation5 + $0x7a8] sm:$0xff]
    %v330 = vld [vmem:[#allocation5 + $0x7b0] sm:$0xff]
    %v331 = vld [vmem:[#allocation5 + $0x7b8] sm:$0xff]
    %v332 = vld [vmem:[#allocation5 + $0x7c0] sm:$0xff]
    %v333 = vld [vmem:[#allocation5 + $0x7c8] sm:$0xff]
    %v334 = vld [vmem:[#allocation5 + $0x7d0] sm:$0xff]
    %v335 = vld [vmem:[#allocation5 + $0x7d8] sm:$0xff]
    %v336 = vld [vmem:[#allocation5 + $0x7e0] sm:$0xff]
    %v337 = vld [vmem:[#allocation5 + $0x7e8] sm:$0xff]
    %v338 = vld [vmem:[#allocation5 + $0x7f0] sm:$0xff]
    %v339 = vld [vmem:[#allocation5 + $0x7f8] sm:$0xff]
    %v340 = vld [vmem:[#allocation5 + $0x800] sm:$0xff]
    %v341 = vld [vmem:[#allocation5 + $0x808] sm:$0xff]
    %v342 = vld [vmem:[#allocation5 + $0x810] sm:$0xff]
    %v343 = vld [vmem:[#allocation5 + $0x818] sm:$0xff]
    %v344 = vld [vmem:[#allocation5 + $0x820] sm:$0xff]
    %v345 = vld [vmem:[#allocation5 + $0x828] sm:$0xff]
    %v346 = vld [vmem:[#allocation5 + $0x830] sm:$0xff]
    %v347 = vld [vmem:[#allocation5 + $0x838] sm:$0xff]
    %v348 = vld [vmem:[#allocation5 + $0x840] sm:$0xff]
    %v349 = vld [vmem:[#allocation5 + $0x848] sm:$0xff]
    %v350 = vld [vmem:[#allocation5 + $0x850] sm:$0xff]
    %v351 = vld [vmem:[#allocation5 + $0x858] sm:$0xff]
    %v352 = vld [vmem:[#allocation5 + $0x860] sm:$0xff]
    %v353 = vld [vmem:[#allocation5 + $0x868] sm:$0xff]
    %v354 = vld [vmem:[#allocation5 + $0x870] sm:$0xff]
    %v355 = vld [vmem:[#allocation5 + $0x878] sm:$0xff]
    %v356 = vld [vmem:[#allocation5 + $0x880] sm:$0xff]
    %v357 = vld [vmem:[#allocation5 + $0x888] sm:$0xff]
    %v358 = vld [vmem:[#allocation5 + $0x890] sm:$0xff]
    %v359 = vld [vmem:[#allocation5 + $0x898] sm:$0xff]
    %v360 = vld [vmem:[#allocation5 + $0x8a0] sm:$0xff]
    %v361 = vld [vmem:[#allocation5 + $0x8a8] sm:$0xff]
    %v362 = vld [vmem:[#allocation5 + $0x8b0] sm:$0xff]
    %v363 = vld [vmem:[#allocation5 + $0x8b8] sm:$0xff]
    %v364 = vld [vmem:[#allocation5 + $0x8c0] sm:$0xff]
    %v365 = vld [vmem:[#allocation5 + $0x8c8] sm:$0xff]
    %v366 = vld [vmem:[#allocation5 + $0x8d0] sm:$0xff]
    %v367 = vld [vmem:[#allocation5 + $0x8d8] sm:$0xff]
    %v368 = vld [vmem:[#allocation5 + $0x8e0] sm:$0xff]
    %v369 = vld [vmem:[#allocation5 + $0x8e8] sm:$0xff]
    %v370 = vld [vmem:[#allocation5 + $0x8f0] sm:$0xff]
    %v371 = vld [vmem:[#allocation5 + $0x8f8] sm:$0xff]
    %v372 = vld [vmem:[#allocation5 + $0x900] sm:$0xff]
    %v373 = vld [vmem:[#allocation5 + $0x908] sm:$0xff]
    %v374 = vld [vmem:[#allocation5 + $0x910] sm:$0xff]
    %v375 = vld [vmem:[#allocation5 + $0x918] sm:$0xff]
    %v376 = vld [vmem:[#allocation5 + $0x920] sm:$0xff]
    %v377 = vld [vmem:[#allocation5 + $0x928] sm:$0xff]
    %v378 = vld [vmem:[#allocation5 + $0x930] sm:$0xff]
    %v379 = vld [vmem:[#allocation5 + $0x938] sm:$0xff]
    %v380 = vld [vmem:[#allocation5 + $0x940] sm:$0xff]
    %v381 = vld [vmem:[#allocation5 + $0x948] sm:$0xff]
    %v382 = vld [vmem:[#allocation5 + $0x950] sm:$0xff]
    %v383 = vld [vmem:[#allocation5 + $0x958] sm:$0xff]
    %v384 = vld [vmem:[#allocation5 + $0x960] sm:$0xff]
    %v385 = vld [vmem:[#allocation5 + $0x968] sm:$0xff]
    %v386 = vld [vmem:[#allocation5 + $0x970] sm:$0xff]
    %v387 = vld [vmem:[#allocation5 + $0x978] sm:$0xff]
    %v388 = vld [vmem:[#allocation5 + $0x980] sm:$0xff]
    %v389 = vld [vmem:[#allocation5 + $0x988] sm:$0xff]
    %v390 = vld [vmem:[#allocation5 + $0x990] sm:$0xff]
    %v391 = vld [vmem:[#allocation5 + $0x998] sm:$0xff]
    %v392 = vld [vmem:[#allocation5 + $0x9a0] sm:$0xff]
    %v393 = vld [vmem:[#allocation5 + $0x9a8] sm:$0xff]
    %v394 = vld [vmem:[#allocation5 + $0x9b0] sm:$0xff]
    %v395 = vld [vmem:[#allocation5 + $0x9b8] sm:$0xff]
    %v396 = vld [vmem:[#allocation5 + $0x9c0] sm:$0xff]
    %v397 = vld [vmem:[#allocation5 + $0x9c8] sm:$0xff]
    %v398 = vld [vmem:[#allocation5 + $0x9d0] sm:$0xff]
    %v399 = vld [vmem:[#allocation5 + $0x9d8] sm:$0xff]
    %v400 = vld [vmem:[#allocation5 + $0x9e0] sm:$0xff]
    %v401 = vld [vmem:[#allocation5 + $0x9e8] sm:$0xff]
    %v402 = vld [vmem:[#allocation5 + $0x9f0] sm:$0xff]
    %v403 = vld [vmem:[#allocation5 + $0x9f8] sm:$0xff]
    %v404 = vld [vmem:[#allocation5 + $0xa00] sm:$0xff]
    %v405 = vld [vmem:[#allocation5 + $0xa08] sm:$0xff]
    %v406 = vld [vmem:[#allocation5 + $0xa10] sm:$0xff]
    %v407 = vld [vmem:[#allocation5 + $0xa18] sm:$0xff]
    %v408 = vld [vmem:[#allocation5 + $0xa20] sm:$0xff]
    %v409 = vld [vmem:[#allocation5 + $0xa28] sm:$0xff]
    %v410 = vld [vmem:[#allocation5 + $0xa30] sm:$0xff]
    %v411 = vld [vmem:[#allocation5 + $0xa38] sm:$0xff]
    %v412 = vld [vmem:[#allocation5 + $0xa40] sm:$0xff]
    %v413 = vld [vmem:[#allocation5 + $0xa48] sm:$0xff]
    %v414 = vld [vmem:[#allocation5 + $0xa50] sm:$0xff]
    %v415 = vld [vmem:[#allocation5 + $0xa58] sm:$0xff]
    %v416 = vld [vmem:[#allocation5 + $0xa60] sm:$0xff]
    %v417 = vld [vmem:[#allocation5 + $0xa68] sm:$0xff]
    %v418 = vld [vmem:[#allocation5 + $0xa70] sm:$0xff]
    %v419 = vld [vmem:[#allocation5 + $0xa78] sm:$0xff]
    %v420 = vld [vmem:[#allocation5 + $0xa80] sm:$0xff]
    %v421 = vld [vmem:[#allocation5 + $0xa88] sm:$0xff]
    %v422 = vld [vmem:[#allocation5 + $0xa90] sm:$0xff]
    %v423 = vld [vmem:[#allocation5 + $0xa98] sm:$0xff]
    %v424 = vld [vmem:[#allocation5 + $0xaa0] sm:$0xff]
    %v425 = vld [vmem:[#allocation5 + $0xaa8] sm:$0xff]
    %v426 = vld [vmem:[#allocation5 + $0xab0] sm:$0xff]
    %v427 = vld [vmem:[#allocation5 + $0xab8] sm:$0xff]
    %v428 = vld [vmem:[#allocation5 + $0xac0] sm:$0xff]
    %v429 = vld [vmem:[#allocation5 + $0xac8] sm:$0xff]
    %v430 = vld [vmem:[#allocation5 + $0xad0] sm:$0xff]
    %v431 = vld [vmem:[#allocation5 + $0xad8] sm:$0xff]
    %v432 = vld [vmem:[#allocation5 + $0xae0] sm:$0xff]
    %v433 = vld [vmem:[#allocation5 + $0xae8] sm:$0xff]
    %v434 = vld [vmem:[#allocation5 + $0xaf0] sm:$0xff]
    %v435 = vld [vmem:[#allocation5 + $0xaf8] sm:$0xff]
    %v436 = vld [vmem:[#allocation5 + $0xb00] sm:$0xff]
    %v437 = vld [vmem:[#allocation5 + $0xb08] sm:$0xff]
    %v438 = vld [vmem:[#allocation5 + $0xb10] sm:$0xff]
    %v439 = vld [vmem:[#allocation5 + $0xb18] sm:$0xff]
    %v440 = vld [vmem:[#allocation5 + $0xb20] sm:$0xff]
    %v441 = vld [vmem:[#allocation5 + $0xb28] sm:$0xff]
    %v442 = vld [vmem:[#allocation5 + $0xb30] sm:$0xff]
    %v443 = vld [vmem:[#allocation5 + $0xb38] sm:$0xff]
    %v444 = vld [vmem:[#allocation5 + $0xb40] sm:$0xff]
    %v445 = vld [vmem:[#allocation5 + $0xb48] sm:$0xff]
    %v446 = vld [vmem:[#allocation5 + $0xb50] sm:$0xff]
    %v447 = vld [vmem:[#allocation5 + $0xb58] sm:$0xff]
    %v448 = vld [vmem:[#allocation5 + $0xb60] sm:$0xff]
    %v449 = vld [vmem:[#allocation5 + $0xb68] sm:$0xff]
    %v450 = vld [vmem:[#allocation5 + $0xb70] sm:$0xff]
    %v451 = vld [vmem:[#allocation5 + $0xb78] sm:$0xff]
    %v452 = vld [vmem:[#allocation5 + $0xb80] sm:$0xff]
    %v453 = vld [vmem:[#allocation5 + $0xb88] sm:$0xff]
    %v454 = vld [vmem:[#allocation5 + $0xb90] sm:$0xff]
    %v455 = vld [vmem:[#allocation5 + $0xb98] sm:$0xff]
    %v456 = vld [vmem:[#allocation5 + $0xba0] sm:$0xff]
    %v457 = vld [vmem:[#allocation5 + $0xba8] sm:$0xff]
    %v458 = vld [vmem:[#allocation5 + $0xbb0] sm:$0xff]
    %v459 = vld [vmem:[#allocation5 + $0xbb8] sm:$0xff]
    %v460 = vld [vmem:[#allocation5 + $0xbc0] sm:$0xff]
    %v461 = vld [vmem:[#allocation5 + $0xbc8] sm:$0xff]
    %v462 = vld [vmem:[#allocation5 + $0xbd0] sm:$0xff]
    %v463 = vld [vmem:[#allocation5 + $0xbd8] sm:$0xff]
    %v464 = vld [vmem:[#allocation5 + $0xbe0] sm:$0xff]
    %v465 = vld [vmem:[#allocation5 + $0xbe8] sm:$0xff]
    %v466 = vld [vmem:[#allocation5 + $0xbf0] sm:$0xff]
    %v467 = vld [vmem:[#allocation5 + $0xbf8] sm:$0xff]
    %v468 = vld [vmem:[#allocation7] sm:$0x1]
    %v470 = vperm.slane %v468, 0
    %496 = vst [vmem:[#allocation1] ss:$4 sm:$0xff] %v60
    %s497 = scalar_lea.vmem [#allocation1], 1
    %498 = vst [vmem:[%s497] ss:$4 sm:$0xff] %v66
    %s499 = scalar_lea.vmem [#allocation1], 2
    %500 = vst [vmem:[%s499] ss:$4 sm:$0xff] %v72
    %s501 = scalar_lea.vmem [#allocation1], 3
    %502 = vst [vmem:[%s501] ss:$4 sm:$0xff] %v78
    %s503 = scalar_lea.vmem [#allocation1], 32
    %504 = vst [vmem:[%s503] ss:$4 sm:$0xff] %v61
    %s505 = scalar_lea.vmem [#allocation1], 33
    %506 = vst [vmem:[%s505] ss:$4 sm:$0xff] %v67
    %s507 = scalar_lea.vmem [#allocation1], 34
    %508 = vst [vmem:[%s507] ss:$4 sm:$0xff] %v73
    %s509 = scalar_lea.vmem [#allocation1], 35
    %510 = vst [vmem:[%s509] ss:$4 sm:$0xff] %v79
    %v511 = vld.sshfl [vmem:[#allocation1] sm:$0xff pattern:$0x73625140]
    %v512 = vld.sshfl [vmem:[#allocation1 + $0x8] sm:$0xff pattern:$0x73625140]
    %v513 = vld.sshfl [vmem:[#allocation1 + $0x10] sm:$0xff pattern:$0x73625140]
    %v514 = vld.sshfl [vmem:[#allocation1 + $0x18] sm:$0xff pattern:$0x73625140]
    %v515 = vld.sshfl [vmem:[#allocation1 + $0x20] sm:$0xff pattern:$0x73625140]
    %v516 = vld.sshfl [vmem:[#allocation1 + $0x28] sm:$0xff pattern:$0x73625140]
    %v517 = vld.sshfl [vmem:[#allocation1 + $0x30] sm:$0xff pattern:$0x73625140]
    %v518 = vld.sshfl [vmem:[#allocation1 + $0x38] sm:$0xff pattern:$0x73625140]
    %519 = vst [vmem:[#allocation1] ss:$4 sm:$0xff] %v62
    %520 = vst [vmem:[%s497] ss:$4 sm:$0xff] %v68
    %521 = vst [vmem:[%s499] ss:$4 sm:$0xff] %v74
    %522 = vst [vmem:[%s501] ss:$4 sm:$0xff] %v80
    %523 = vst [vmem:[%s503] ss:$4 sm:$0xff] %v63
    %524 = vst [vmem:[%s505] ss:$4 sm:$0xff] %v69
    %525 = vst [vmem:[%s507] ss:$4 sm:$0xff] %v75
    %526 = vst [vmem:[%s509] ss:$4 sm:$0xff] %v81
    %v527 = vld.sshfl [vmem:[#allocation1] sm:$0xff pattern:$0x73625140]
    %v528 = vld.sshfl [vmem:[#allocation1 + $0x8] sm:$0xff pattern:$0x73625140]
    %v529 = vld.sshfl [vmem:[#allocation1 + $0x10] sm:$0xff pattern:$0x73625140]
    %v530 = vld.sshfl [vmem:[#allocation1 + $0x18] sm:$0xff pattern:$0x73625140]
    %v531 = vld.sshfl [vmem:[#allocation1 + $0x20] sm:$0xff pattern:$0x73625140]
    %v532 = vld.sshfl [vmem:[#allocation1 + $0x28] sm:$0xff pattern:$0x73625140]
    %v533 = vld.sshfl [vmem:[#allocation1 + $0x30] sm:$0xff pattern:$0x73625140]
    %v534 = vld.sshfl [vmem:[#allocation1 + $0x38] sm:$0xff pattern:$0x73625140]
    %535 = vst [vmem:[#allocation1] ss:$4 sm:$0xff] %v64
    %536 = vst [vmem:[%s497] ss:$4 sm:$0xff] %v70
    %537 = vst [vmem:[%s499] ss:$4 sm:$0xff] %v76
    %538 = vst [vmem:[%s501] ss:$4 sm:$0xff] %v82
    %539 = vst [vmem:[%s503] ss:$4 sm:$0xff] %v65
    %540 = vst [vmem:[%s505] ss:$4 sm:$0xff] %v71
    %541 = vst [vmem:[%s507] ss:$4 sm:$0xff] %v77
    %542 = vst [vmem:[%s509] ss:$4 sm:$0xff] %v83
    %v543 = vld.sshfl [vmem:[#allocation1] sm:$0xff pattern:$0x73625140]
    %v544 = vld.sshfl [vmem:[#allocation1 + $0x8] sm:$0xff pattern:$0x73625140]
    %v545 = vld.sshfl [vmem:[#allocation1 + $0x10] sm:$0xff pattern:$0x73625140]
    %v546 = vld.sshfl [vmem:[#allocation1 + $0x18] sm:$0xff pattern:$0x73625140]
    %v547 = vld.sshfl [vmem:[#allocation1 + $0x20] sm:$0xff pattern:$0x73625140]
    %v548 = vld.sshfl [vmem:[#allocation1 + $0x28] sm:$0xff pattern:$0x73625140]
    %v549 = vld.sshfl [vmem:[#allocation1 + $0x30] sm:$0xff pattern:$0x73625140]
    %v550 = vld.sshfl [vmem:[#allocation1 + $0x38] sm:$0xff pattern:$0x73625140]
    %575 = vmatpush.msra.mxu0 %v99
    %576 = vmatpush.msra.mxu0 %v98
    %577 = vmatpush.msra.mxu0 %v97
    %578 = vmatpush.msra.mxu0 %v96
    %579 = vmatpush.msra.mxu0 %v95
    %580 = vmatpush.msra.mxu0 %v94
    %581 = vmatpush.msra.mxu0 %v93
    %582 = vmatpush.msra.mxu0 %v92
    %583 = vmatpush.msra.mxu0 %v91
    %584 = vmatpush.msra.mxu0 %v90
    %585 = vmatpush.msra.mxu0 %v89
    %586 = vmatpush.msra.mxu0 %v88
    %587 = vmatpush.msra.mxu0 %v87
    %588 = vmatpush.msra.mxu0 %v86
    %589 = vmatpush.msra.mxu0 %v85
    %590 = vmatpush.msra.mxu0 %v84
    %591 = vmatmul.f32.gmra.mxu0 %v511
    %v592 = vpop.f32.mrf.mxu0
    %v593 = vadd.f32 %v470, %v592
    %594 = vdwg.mxu0
    %595 = vmatpush.msra.mxu0 %v115
    %596 = vmatpush.msra.mxu0 %v114
    %597 = vmatpush.msra.mxu0 %v113
    %598 = vmatpush.msra.mxu0 %v112
    %599 = vmatpush.msra.mxu0 %v111
    %600 = vmatpush.msra.mxu0 %v110
    %601 = vmatpush.msra.mxu0 %v109
    %602 = vmatpush.msra.mxu0 %v108
    %603 = vmatpush.msra.mxu0 %v107
    %604 = vmatpush.msra.mxu0 %v106
    %605 = vmatpush.msra.mxu0 %v105
    %606 = vmatpush.msra.mxu0 %v104
    %607 = vmatpush.msra.mxu0 %v103
    %608 = vmatpush.msra.mxu0 %v102
    %609 = vmatpush.msra.mxu0 %v101
    %610 = vmatpush.msra.mxu0 %v100
    %611 = vmatmul.f32.gmra.mxu0 %v512
    %v612 = vpop.f32.mrf.mxu0
    %v613 = vadd.f32 %v593, %v612
    %614 = vdwg.mxu0
    %615 = vmatpush.msra.mxu0 %v131
    %616 = vmatpush.msra.mxu0 %v130
    %617 = vmatpush.msra.mxu0 %v129
    %618 = vmatpush.msra.mxu0 %v128
    %619 = vmatpush.msra.mxu0 %v127
    %620 = vmatpush.msra.mxu0 %v126
    %621 = vmatpush.msra.mxu0 %v125
    %622 = vmatpush.msra.mxu0 %v124
    %623 = vmatpush.msra.mxu0 %v123
    %624 = vmatpush.msra.mxu0 %v122
    %625 = vmatpush.msra.mxu0 %v121
    %626 = vmatpush.msra.mxu0 %v120
    %627 = vmatpush.msra.mxu0 %v119
    %628 = vmatpush.msra.mxu0 %v118
    %629 = vmatpush.msra.mxu0 %v117
    %630 = vmatpush.msra.mxu0 %v116
    %631 = vmatmul.f32.gmra.mxu0 %v513
    %v632 = vpop.f32.mrf.mxu0
    %v633 = vadd.f32 %v613, %v632
    %634 = vdwg.mxu0
    %635 = vmatpush.msra.mxu0 %v147
    %636 = vmatpush.msra.mxu0 %v146
    %637 = vmatpush.msra.mxu0 %v145
    %638 = vmatpush.msra.mxu0 %v144
    %639 = vmatpush.msra.mxu0 %v143
    %640 = vmatpush.msra.mxu0 %v142
    %641 = vmatpush.msra.mxu0 %v141
    %642 = vmatpush.msra.mxu0 %v140
    %643 = vmatpush.msra.mxu0 %v139
    %644 = vmatpush.msra.mxu0 %v138
    %645 = vmatpush.msra.mxu0 %v137
    %646 = vmatpush.msra.mxu0 %v136
    %647 = vmatpush.msra.mxu0 %v135
    %648 = vmatpush.msra.mxu0 %v134
    %649 = vmatpush.msra.mxu0 %v133
    %650 = vmatpush.msra.mxu0 %v132
    %651 = vmatmul.f32.gmra.mxu0 %v514
    %v652 = vpop.f32.mrf.mxu0
    %v653 = vadd.f32 %v633, %v652
    %654 = vdwg.mxu0
    %655 = vmatpush.msra.mxu0 %v163
    %656 = vmatpush.msra.mxu0 %v162
    %657 = vmatpush.msra.mxu0 %v161
    %658 = vmatpush.msra.mxu0 %v160
    %659 = vmatpush.msra.mxu0 %v159
    %660 = vmatpush.msra.mxu0 %v158
    %661 = vmatpush.msra.mxu0 %v157
    %662 = vmatpush.msra.mxu0 %v156
    %663 = vmatpush.msra.mxu0 %v155
    %664 = vmatpush.msra.mxu0 %v154
    %665 = vmatpush.msra.mxu0 %v153
    %666 = vmatpush.msra.mxu0 %v152
    %667 = vmatpush.msra.mxu0 %v151
    %668 = vmatpush.msra.mxu0 %v150
    %669 = vmatpush.msra.mxu0 %v149
    %670 = vmatpush.msra.mxu0 %v148
    %671 = vmatmul.f32.gmra.mxu0 %v515
    %v672 = vpop.f32.mrf.mxu0
    %v673 = vadd.f32 %v653, %v672
    %674 = vdwg.mxu0
    %675 = vmatpush.msra.mxu0 %v179
    %676 = vmatpush.msra.mxu0 %v178
    %677 = vmatpush.msra.mxu0 %v177
    %678 = vmatpush.msra.mxu0 %v176
    %679 = vmatpush.msra.mxu0 %v175
    %680 = vmatpush.msra.mxu0 %v174
    %681 = vmatpush.msra.mxu0 %v173
    %682 = vmatpush.msra.mxu0 %v172
    %683 = vmatpush.msra.mxu0 %v171
    %684 = vmatpush.msra.mxu0 %v170
    %685 = vmatpush.msra.mxu0 %v169
    %686 = vmatpush.msra.mxu0 %v168
    %687 = vmatpush.msra.mxu0 %v167
    %688 = vmatpush.msra.mxu0 %v166
    %689 = vmatpush.msra.mxu0 %v165
    %690 = vmatpush.msra.mxu0 %v164
    %691 = vmatmul.f32.gmra.mxu0 %v516
    %v692 = vpop.f32.mrf.mxu0
    %v693 = vadd.f32 %v673, %v692
    %694 = vdwg.mxu0
    %695 = vmatpush.msra.mxu0 %v195
    %696 = vmatpush.msra.mxu0 %v194
    %697 = vmatpush.msra.mxu0 %v193
    %698 = vmatpush.msra.mxu0 %v192
    %699 = vmatpush.msra.mxu0 %v191
    %700 = vmatpush.msra.mxu0 %v190
    %701 = vmatpush.msra.mxu0 %v189
    %702 = vmatpush.msra.mxu0 %v188
    %703 = vmatpush.msra.mxu0 %v187
    %704 = vmatpush.msra.mxu0 %v186
    %705 = vmatpush.msra.mxu0 %v185
    %706 = vmatpush.msra.mxu0 %v184
    %707 = vmatpush.msra.mxu0 %v183
    %708 = vmatpush.msra.mxu0 %v182
    %709 = vmatpush.msra.mxu0 %v181
    %710 = vmatpush.msra.mxu0 %v180
    %711 = vmatmul.f32.gmra.mxu0 %v517
    %v712 = vpop.f32.mrf.mxu0
    %v713 = vadd.f32 %v693, %v712
    %714 = vdwg.mxu0
    %715 = vmatpush.msra.mxu0 %v211
    %716 = vmatpush.msra.mxu0 %v210
    %717 = vmatpush.msra.mxu0 %v209
    %718 = vmatpush.msra.mxu0 %v208
    %719 = vmatpush.msra.mxu0 %v207
    %720 = vmatpush.msra.mxu0 %v206
    %721 = vmatpush.msra.mxu0 %v205
    %722 = vmatpush.msra.mxu0 %v204
    %723 = vmatpush.msra.mxu0 %v203
    %724 = vmatpush.msra.mxu0 %v202
    %725 = vmatpush.msra.mxu0 %v201
    %726 = vmatpush.msra.mxu0 %v200
    %727 = vmatpush.msra.mxu0 %v199
    %728 = vmatpush.msra.mxu0 %v198
    %729 = vmatpush.msra.mxu0 %v197
    %730 = vmatpush.msra.mxu0 %v196
    %731 = vmatmul.f32.gmra.mxu0 %v518
    %v732 = vpop.f32.mrf.mxu0
    %v733 = vadd.f32 %v713, %v732
    %734 = vdwg.mxu0
    %735 = vmatpush.msra.mxu0 %v227
    %736 = vmatpush.msra.mxu0 %v226
    %737 = vmatpush.msra.mxu0 %v225
    %738 = vmatpush.msra.mxu0 %v224
    %739 = vmatpush.msra.mxu0 %v223
    %740 = vmatpush.msra.mxu0 %v222
    %741 = vmatpush.msra.mxu0 %v221
    %742 = vmatpush.msra.mxu0 %v220
    %743 = vmatpush.msra.mxu0 %v219
    %744 = vmatpush.msra.mxu0 %v218
    %745 = vmatpush.msra.mxu0 %v217
    %746 = vmatpush.msra.mxu0 %v216
    %747 = vmatpush.msra.mxu0 %v215
    %748 = vmatpush.msra.mxu0 %v214
    %749 = vmatpush.msra.mxu0 %v213
    %750 = vmatpush.msra.mxu0 %v212
    %751 = vmatmul.f32.gmra.mxu0 %v527
    %v752 = vpop.f32.mrf.mxu0
    %v753 = vadd.f32 %v733, %v752
    %754 = vdwg.mxu0
    %755 = vmatpush.msra.mxu0 %v243
    %756 = vmatpush.msra.mxu0 %v242
    %757 = vmatpush.msra.mxu0 %v241
    %758 = vmatpush.msra.mxu0 %v240
    %759 = vmatpush.msra.mxu0 %v239
    %760 = vmatpush.msra.mxu0 %v238
    %761 = vmatpush.msra.mxu0 %v237
    %762 = vmatpush.msra.mxu0 %v236
    %763 = vmatpush.msra.mxu0 %v235
    %764 = vmatpush.msra.mxu0 %v234
    %765 = vmatpush.msra.mxu0 %v233
    %766 = vmatpush.msra.mxu0 %v232
    %767 = vmatpush.msra.mxu0 %v231
    %768 = vmatpush.msra.mxu0 %v230
    %769 = vmatpush.msra.mxu0 %v229
    %770 = vmatpush.msra.mxu0 %v228
    %771 = vmatmul.f32.gmra.mxu0 %v528
    %v772 = vpop.f32.mrf.mxu0
    %v773 = vadd.f32 %v753, %v772
    %774 = vdwg.mxu0
    %775 = vmatpush.msra.mxu0 %v259
    %776 = vmatpush.msra.mxu0 %v258
    %777 = vmatpush.msra.mxu0 %v257
    %778 = vmatpush.msra.mxu0 %v256
    %779 = vmatpush.msra.mxu0 %v255
    %780 = vmatpush.msra.mxu0 %v254
    %781 = vmatpush.msra.mxu0 %v253
    %782 = vmatpush.msra.mxu0 %v252
    %783 = vmatpush.msra.mxu0 %v251
    %784 = vmatpush.msra.mxu0 %v250
    %785 = vmatpush.msra.mxu0 %v249
    %786 = vmatpush.msra.mxu0 %v248
    %787 = vmatpush.msra.mxu0 %v247
    %788 = vmatpush.msra.mxu0 %v246
    %789 = vmatpush.msra.mxu0 %v245
    %790 = vmatpush.msra.mxu0 %v244
    %791 = vmatmul.f32.gmra.mxu0 %v529
    %v792 = vpop.f32.mrf.mxu0
    %v793 = vadd.f32 %v773, %v792
    %794 = vdwg.mxu0
    %795 = vmatpush.msra.mxu0 %v275
    %796 = vmatpush.msra.mxu0 %v274
    %797 = vmatpush.msra.mxu0 %v273
    %798 = vmatpush.msra.mxu0 %v272
    %799 = vmatpush.msra.mxu0 %v271
    %800 = vmatpush.msra.mxu0 %v270
    %801 = vmatpush.msra.mxu0 %v269
    %802 = vmatpush.msra.mxu0 %v268
    %803 = vmatpush.msra.mxu0 %v267
    %804 = vmatpush.msra.mxu0 %v266
    %805 = vmatpush.msra.mxu0 %v265
    %806 = vmatpush.msra.mxu0 %v264
    %807 = vmatpush.msra.mxu0 %v263
    %808 = vmatpush.msra.mxu0 %v262
    %809 = vmatpush.msra.mxu0 %v261
    %810 = vmatpush.msra.mxu0 %v260
    %811 = vmatmul.f32.gmra.mxu0 %v530
    %v812 = vpop.f32.mrf.mxu0
    %v813 = vadd.f32 %v793, %v812
    %814 = vdwg.mxu0
    %815 = vmatpush.msra.mxu0 %v291
    %816 = vmatpush.msra.mxu0 %v290
    %817 = vmatpush.msra.mxu0 %v289
    %818 = vmatpush.msra.mxu0 %v288
    %819 = vmatpush.msra.mxu0 %v287
    %820 = vmatpush.msra.mxu0 %v286
    %821 = vmatpush.msra.mxu0 %v285
    %822 = vmatpush.msra.mxu0 %v284
    %823 = vmatpush.msra.mxu0 %v283
    %824 = vmatpush.msra.mxu0 %v282
    %825 = vmatpush.msra.mxu0 %v281
    %826 = vmatpush.msra.mxu0 %v280
    %827 = vmatpush.msra.mxu0 %v279
    %828 = vmatpush.msra.mxu0 %v278
    %829 = vmatpush.msra.mxu0 %v277
    %830 = vmatpush.msra.mxu0 %v276
    %831 = vmatmul.f32.gmra.mxu0 %v531
    %v832 = vpop.f32.mrf.mxu0
    %v833 = vadd.f32 %v813, %v832
    %834 = vdwg.mxu0
    %835 = vmatpush.msra.mxu0 %v307
    %836 = vmatpush.msra.mxu0 %v306
    %837 = vmatpush.msra.mxu0 %v305
    %838 = vmatpush.msra.mxu0 %v304
    %839 = vmatpush.msra.mxu0 %v303
    %840 = vmatpush.msra.mxu0 %v302
    %841 = vmatpush.msra.mxu0 %v301
    %842 = vmatpush.msra.mxu0 %v300
    %843 = vmatpush.msra.mxu0 %v299
    %844 = vmatpush.msra.mxu0 %v298
    %845 = vmatpush.msra.mxu0 %v297
    %846 = vmatpush.msra.mxu0 %v296
    %847 = vmatpush.msra.mxu0 %v295
    %848 = vmatpush.msra.mxu0 %v294
    %849 = vmatpush.msra.mxu0 %v293
    %850 = vmatpush.msra.mxu0 %v292
    %851 = vmatmul.f32.gmra.mxu0 %v532
    %v852 = vpop.f32.mrf.mxu0
    %v853 = vadd.f32 %v833, %v852
    %854 = vdwg.mxu0
    %855 = vmatpush.msra.mxu0 %v323
    %856 = vmatpush.msra.mxu0 %v322
    %857 = vmatpush.msra.mxu0 %v321
    %858 = vmatpush.msra.mxu0 %v320
    %859 = vmatpush.msra.mxu0 %v319
    %860 = vmatpush.msra.mxu0 %v318
    %861 = vmatpush.msra.mxu0 %v317
    %862 = vmatpush.msra.mxu0 %v316
    %863 = vmatpush.msra.mxu0 %v315
    %864 = vmatpush.msra.mxu0 %v314
    %865 = vmatpush.msra.mxu0 %v313
    %866 = vmatpush.msra.mxu0 %v312
    %867 = vmatpush.msra.mxu0 %v311
    %868 = vmatpush.msra.mxu0 %v310
    %869 = vmatpush.msra.mxu0 %v309
    %870 = vmatpush.msra.mxu0 %v308
    %871 = vmatmul.f32.gmra.mxu0 %v533
    %v872 = vpop.f32.mrf.mxu0
    %v873 = vadd.f32 %v853, %v872
    %874 = vdwg.mxu0
    %875 = vmatpush.msra.mxu0 %v339
    %876 = vmatpush.msra.mxu0 %v338
    %877 = vmatpush.msra.mxu0 %v337
    %878 = vmatpush.msra.mxu0 %v336
    %879 = vmatpush.msra.mxu0 %v335
    %880 = vmatpush.msra.mxu0 %v334
    %881 = vmatpush.msra.mxu0 %v333
    %882 = vmatpush.msra.mxu0 %v332
    %883 = vmatpush.msra.mxu0 %v331
    %884 = vmatpush.msra.mxu0 %v330
    %885 = vmatpush.msra.mxu0 %v329
    %886 = vmatpush.msra.mxu0 %v328
    %887 = vmatpush.msra.mxu0 %v327
    %888 = vmatpush.msra.mxu0 %v326
    %889 = vmatpush.msra.mxu0 %v325
    %890 = vmatpush.msra.mxu0 %v324
    %891 = vmatmul.f32.gmra.mxu0 %v534
    %v892 = vpop.f32.mrf.mxu0
    %v893 = vadd.f32 %v873, %v892
    %894 = vdwg.mxu0
    %895 = vmatpush.msra.mxu0 %v355
    %896 = vmatpush.msra.mxu0 %v354
    %897 = vmatpush.msra.mxu0 %v353
    %898 = vmatpush.msra.mxu0 %v352
    %899 = vmatpush.msra.mxu0 %v351
    %900 = vmatpush.msra.mxu0 %v350
    %901 = vmatpush.msra.mxu0 %v349
    %902 = vmatpush.msra.mxu0 %v348
    %903 = vmatpush.msra.mxu0 %v347
    %904 = vmatpush.msra.mxu0 %v346
    %905 = vmatpush.msra.mxu0 %v345
    %906 = vmatpush.msra.mxu0 %v344
    %907 = vmatpush.msra.mxu0 %v343
    %908 = vmatpush.msra.mxu0 %v342
    %909 = vmatpush.msra.mxu0 %v341
    %910 = vmatpush.msra.mxu0 %v340
    %911 = vmatmul.f32.gmra.mxu0 %v543
    %v912 = vpop.f32.mrf.mxu0
    %v913 = vadd.f32 %v893, %v912
    %914 = vdwg.mxu0
    %915 = vmatpush.msra.mxu0 %v371
    %916 = vmatpush.msra.mxu0 %v370
    %917 = vmatpush.msra.mxu0 %v369
    %918 = vmatpush.msra.mxu0 %v368
    %919 = vmatpush.msra.mxu0 %v367
    %920 = vmatpush.msra.mxu0 %v366
    %921 = vmatpush.msra.mxu0 %v365
    %922 = vmatpush.msra.mxu0 %v364
    %923 = vmatpush.msra.mxu0 %v363
    %924 = vmatpush.msra.mxu0 %v362
    %925 = vmatpush.msra.mxu0 %v361
    %926 = vmatpush.msra.mxu0 %v360
    %927 = vmatpush.msra.mxu0 %v359
    %928 = vmatpush.msra.mxu0 %v358
    %929 = vmatpush.msra.mxu0 %v357
    %930 = vmatpush.msra.mxu0 %v356
    %931 = vmatmul.f32.gmra.mxu0 %v544
    %v932 = vpop.f32.mrf.mxu0
    %v933 = vadd.f32 %v913, %v932
    %934 = vdwg.mxu0
    %935 = vmatpush.msra.mxu0 %v387
    %936 = vmatpush.msra.mxu0 %v386
    %937 = vmatpush.msra.mxu0 %v385
    %938 = vmatpush.msra.mxu0 %v384
    %939 = vmatpush.msra.mxu0 %v383
    %940 = vmatpush.msra.mxu0 %v382
    %941 = vmatpush.msra.mxu0 %v381
    %942 = vmatpush.msra.mxu0 %v380
    %943 = vmatpush.msra.mxu0 %v379
    %944 = vmatpush.msra.mxu0 %v378
    %945 = vmatpush.msra.mxu0 %v377
    %946 = vmatpush.msra.mxu0 %v376
    %947 = vmatpush.msra.mxu0 %v375
    %948 = vmatpush.msra.mxu0 %v374
    %949 = vmatpush.msra.mxu0 %v373
    %950 = vmatpush.msra.mxu0 %v372
    %951 = vmatmul.f32.gmra.mxu0 %v545
    %v952 = vpop.f32.mrf.mxu0
    %v953 = vadd.f32 %v933, %v952
    %954 = vdwg.mxu0
    %955 = vmatpush.msra.mxu0 %v403
    %956 = vmatpush.msra.mxu0 %v402
    %957 = vmatpush.msra.mxu0 %v401
    %958 = vmatpush.msra.mxu0 %v400
    %959 = vmatpush.msra.mxu0 %v399
    %960 = vmatpush.msra.mxu0 %v398
    %961 = vmatpush.msra.mxu0 %v397
    %962 = vmatpush.msra.mxu0 %v396
    %963 = vmatpush.msra.mxu0 %v395
    %964 = vmatpush.msra.mxu0 %v394
    %965 = vmatpush.msra.mxu0 %v393
    %966 = vmatpush.msra.mxu0 %v392
    %967 = vmatpush.msra.mxu0 %v391
    %968 = vmatpush.msra.mxu0 %v390
    %969 = vmatpush.msra.mxu0 %v389
    %970 = vmatpush.msra.mxu0 %v388
    %971 = vmatmul.f32.gmra.mxu0 %v546
    %v972 = vpop.f32.mrf.mxu0
    %v973 = vadd.f32 %v953, %v972
    %974 = vdwg.mxu0
    %975 = vmatpush.msra.mxu0 %v419
    %976 = vmatpush.msra.mxu0 %v418
    %977 = vmatpush.msra.mxu0 %v417
    %978 = vmatpush.msra.mxu0 %v416
    %979 = vmatpush.msra.mxu0 %v415
    %980 = vmatpush.msra.mxu0 %v414
    %981 = vmatpush.msra.mxu0 %v413
    %982 = vmatpush.msra.mxu0 %v412
    %983 = vmatpush.msra.mxu0 %v411
    %984 = vmatpush.msra.mxu0 %v410
    %985 = vmatpush.msra.mxu0 %v409
    %986 = vmatpush.msra.mxu0 %v408
    %987 = vmatpush.msra.mxu0 %v407
    %988 = vmatpush.msra.mxu0 %v406
    %989 = vmatpush.msra.mxu0 %v405
    %990 = vmatpush.msra.mxu0 %v404
    %991 = vmatmul.f32.gmra.mxu0 %v547
    %v992 = vpop.f32.mrf.mxu0
    %v993 = vadd.f32 %v973, %v992
    %994 = vdwg.mxu0
    %995 = vmatpush.msra.mxu0 %v435
    %996 = vmatpush.msra.mxu0 %v434
    %997 = vmatpush.msra.mxu0 %v433
    %998 = vmatpush.msra.mxu0 %v432
    %999 = vmatpush.msra.mxu0 %v431
    %1000 = vmatpush.msra.mxu0 %v430
    %1001 = vmatpush.msra.mxu0 %v429
    %1002 = vmatpush.msra.mxu0 %v428
    %1003 = vmatpush.msra.mxu0 %v427
    %1004 = vmatpush.msra.mxu0 %v426
    %1005 = vmatpush.msra.mxu0 %v425
    %1006 = vmatpush.msra.mxu0 %v424
    %1007 = vmatpush.msra.mxu0 %v423
    %1008 = vmatpush.msra.mxu0 %v422
    %1009 = vmatpush.msra.mxu0 %v421
    %1010 = vmatpush.msra.mxu0 %v420
    %1011 = vmatmul.f32.gmra.mxu0 %v548
    %v1012 = vpop.f32.mrf.mxu0
    %v1013 = vadd.f32 %v993, %v1012
    %1014 = vdwg.mxu0
    %1015 = vmatpush.msra.mxu0 %v451
    %1016 = vmatpush.msra.mxu0 %v450
    %1017 = vmatpush.msra.mxu0 %v449
    %1018 = vmatpush.msra.mxu0 %v448
    %1019 = vmatpush.msra.mxu0 %v447
    %1020 = vmatpush.msra.mxu0 %v446
    %1021 = vmatpush.msra.mxu0 %v445
    %1022 = vmatpush.msra.mxu0 %v444
    %1023 = vmatpush.msra.mxu0 %v443
    %1024 = vmatpush.msra.mxu0 %v442
    %1025 = vmatpush.msra.mxu0 %v441
    %1026 = vmatpush.msra.mxu0 %v440
    %1027 = vmatpush.msra.mxu0 %v439
    %1028 = vmatpush.msra.mxu0 %v438
    %1029 = vmatpush.msra.mxu0 %v437
    %1030 = vmatpush.msra.mxu0 %v436
    %1031 = vmatmul.f32.gmra.mxu0 %v549
    %v1032 = vpop.f32.mrf.mxu0
    %v1033 = vadd.f32 %v1013, %v1032
    %1034 = vdwg.mxu0
    %1035 = vmatpush.msra.mxu0 %v467
    %1036 = vmatpush.msra.mxu0 %v466
    %1037 = vmatpush.msra.mxu0 %v465
    %1038 = vmatpush.msra.mxu0 %v464
    %1039 = vmatpush.msra.mxu0 %v463
    %1040 = vmatpush.msra.mxu0 %v462
    %1041 = vmatpush.msra.mxu0 %v461
    %1042 = vmatpush.msra.mxu0 %v460
    %1043 = vmatpush.msra.mxu0 %v459
    %1044 = vmatpush.msra.mxu0 %v458
    %1045 = vmatpush.msra.mxu0 %v457
    %1046 = vmatpush.msra.mxu0 %v456
    %1047 = vmatpush.msra.mxu0 %v455
    %1048 = vmatpush.msra.mxu0 %v454
    %1049 = vmatpush.msra.mxu0 %v453
    %1050 = vmatpush.msra.mxu0 %v452
    %1051 = vmatmul.f32.gmra.mxu0 %v550
    %v1052 = vpop.f32.mrf.mxu0
    %v1053 = vadd.f32 %v1033, %v1052
    %1054 = vdwg.mxu0
    %1055 = vst [vmem:[#allocation8] sm:$0xff] %v1053
    // Predicated region
    $region26: #{tpu_custom_call.1} parent=1 // pred_check
      _
    $region27: #{tpu_custom_call.1} parent=1 // pred_check_branch
      %1057 = sbr.rel (0) target = $region29
    $region28: #{tpu_custom_call.1} parent=1 // pred_region
      %1059 = vsyncadd [#allocation4], 96
      %s1060 = sshll.u32 [#allocation8], 4
      %s1061 = int_to_ptr.vmem [resolvable:$true] %s1060
      %s1062 = sshll.u32 %s3, 4
      %s1063 = int_to_ptr.hbm [resolvable:$true] %s1062
      %1068 = dma.vmem_to_hbm [thread:$0]  %s1061, 32, %s1063, [#allocation4], 32, 32, 2
    $region29: #{tpu_custom_call.1} parent=1 // pred_fallthru
      _
    // Predicated region
    $region30: #{tpu_custom_call.1} parent=1 // pred_check
      _
    $region31: #{tpu_custom_call.1} parent=1 // pred_check_branch
      %1070 = sbr.rel (0) target = $region33
    $region32: #{tpu_custom_call.1} parent=1 // pred_region
      %1072 = dma.done [#allocation4], 128
    $region33: #{tpu_custom_call.1} parent=1 // pred_fallthru
      _
    %1073 = vsyncpa [#allocation3], 1
    %1074 = vsyncpa [#allocation6], 1
    %1075 = vsyncpa [#allocation4], 1

</llo_original>
